<compile_context>
chip_gen: v7x
topology: tpu7x:2x2x1
jax: 0.10.0
libtpu: 0.0.40
codegen_flags: <defaults>
</compile_context>

<pallas_src>
import functools

import jax
import jax.numpy as jnp
from jax.experimental import pallas as pl
from jax.experimental.pallas import tpu as pltpu


# ----------------------------- RoPE cache (matches the PyTorch module) -------
def build_rope_cache(dim: int, max_seq_len: int, base: float = 10000.0,
                     scale: float = 1.0):
    """Matches RotaryEmbedding._rope_init / build_rope_cache."""
    inv_freq = 1.0 / (scale * base ** (jnp.arange(0, dim, 2, dtype=jnp.float32) / dim))
    t = jnp.arange(max_seq_len, dtype=jnp.float32)
    freqs = jnp.outer(t, inv_freq)                       # (max_seq_len, dim//2)
    emb = jnp.concatenate([freqs, freqs], axis=-1)       # (max_seq_len, dim)
    return jnp.cos(emb), jnp.sin(emb)                    # float32


# ----------------------------- table prep (hoisted, call once) ---------------
def _choose_lane_width(seq_len: int, head_dim: int) -> int:
    """Pick a lane-dense last-dim width that is a free reshape of (T, D)."""
    if head_dim % 128 == 0:
        return head_dim
    if 128 % head_dim == 0 and (seq_len * head_dim) % 128 == 0:
        return 128                      # pack 128 // D sequence positions per row
    return head_dim                     # fallback: correct, just not lane-dense


def build_rope_kernel_tables(cos_cached, sin_cached, seq_len: int, head_dim: int):
    """Precompute kernel-ready tables (do this once per seq_len, not per step).

    Tables stay in f32 (exact math, matches the PyTorch module; they are tiny).
    """
    assert cos_cached.shape[-1] == head_dim
    assert head_dim % 2 == 0, "RoPE rotate_half requires an even head_dim"
    half = head_dim // 2

    cos = cos_cached[:seq_len].astype(jnp.float32)       # (T, D)
    sin = sin_cached[:seq_len].astype(jnp.float32)       # (T, D)

    lower = (jnp.arange(head_dim) < half)[None, :]       # first half of each D-seg
    sin_a = jnp.where(lower, -sin, 0.0)   # multiplies roll(x, -half) = x[.., d+half]
    sin_b = jnp.where(lower, 0.0, sin)    # multiplies roll(x, +half) = x[.., d-half]

    lane = _choose_lane_width(seq_len, head_dim)
    rows = (seq_len * head_dim) // lane
    rs = lambda a: a.reshape(rows, lane)                 # free reshape (contiguous)
    return {"cos": rs(cos), "sin_a": rs(sin_a), "sin_b": rs(sin_b),
            "lane": lane, "rows": rows, "half": half}


# ----------------------------- tile-size heuristic ----------------------------
_MIN_BLOCK_BYTES = 512 * 1024           # per q block: bandwidth plateau starts here
_MAX_BLOCK_BYTES = 2 * 1024 * 1024      # per q block: keeps pipeline VMEM small
_MAX_RESIDENT_TABLE_BYTES = 24 * 1024 * 1024   # all three f32 tables together


def _divisors(n: int):
    return [d for d in range(1, n + 1) if n % d == 0]


def _candidate_tiles(n_flat: int, rows: int, bh: int):
    """Legal (row_tile, case) pairs over the flattened (bh*rows, lane) view.

    Legal = divides n_flat, and row_tile % 8 == 0 or row_tile == n_flat
    (Mosaic (8,128) block constraint), and either covers whole heads
    ("whole_heads": row_tile % rows == 0) or stays inside one head
    ("within_head": rows % row_tile == 0) so the table period lines up.
    """
    cands = []
    for h in _divisors(bh):
        rt = rows * h
        if rt % 8 == 0 or rt == n_flat:
            cands.append((rt, "whole_heads"))
    for d in _divisors(rows):
        if d != rows and d % 8 == 0:
            cands.append((d, "within_head"))
    return cands


def _pick_flat_tile(n_flat: int, rows: int, lane: int, itemsize: int,
                    min_steps: int = 2):
    bh = n_flat // rows
    min_rows = max(8, _MIN_BLOCK_BYTES // max(1, lane * itemsize))
    cap_rows = max(min_rows, _MAX_BLOCK_BYTES // max(1, lane * itemsize))

    cands = _candidate_tiles(n_flat, rows, bh)            # always non-empty (rt=n)
    good = [c for c in cands if n_flat // c[0] >= min_steps]
    pool = good if good else cands

    in_range = [c for c in pool if min_rows <= c[0] <= cap_rows]
    if in_range:
        # Smallest block that already saturates HBM BW; prefer whole-head blocks.
        return min(in_range, key=lambda c: (c[0], c[1] != "whole_heads"))
    below = [c for c in pool if c[0] < min_rows]
    if below:
        return max(below, key=lambda c: (c[0], c[1] == "whole_heads"))
    return min(pool, key=lambda c: (c[0], c[1] != "whole_heads"))


# ----------------------------- Pallas kernel ---------------------------------
def _rope_kernel(q_ref, k_ref, cos_ref, sina_ref, sinb_ref, qo_ref, ko_ref, *,
                 half: int, row_tile: int, period_blocks: int,
                 slice_tables: bool):
    # q_ref/k_ref/outputs: (row_tile, lane).  Tables are either exactly
    # (row_tile, lane) (already aligned to this block) or the VMEM-resident
    # full table (rows, lane) that we slice with the grid position.
    if slice_tables:
        start = (pl.program_id(0) % period_blocks) * row_tile
        start = pl.multiple_of(start, row_tile)
        cos = cos_ref[pl.ds(start, row_tile), :]
        sin_a = sina_ref[pl.ds(start, row_tile), :]
        sin_b = sinb_ref[pl.ds(start, row_tile), :]
    else:
        cos = cos_ref[...]
        sin_a = sina_ref[...]
        sin_b = sinb_ref[...]

    def _apply(x_ref, o_ref):
        x = x_ref[...].astype(jnp.float32)          # f32 math (matches module)
        x_up = jnp.roll(x, -half, axis=-1)          # lane j -> x[..., j + half]
        x_dn = jnp.roll(x, half, axis=-1)           # lane j -> x[..., j - half]
        o_ref[...] = (x * cos + x_up * sin_a + x_dn * sin_b).astype(o_ref.dtype)

    _apply(q_ref, qo_ref)
    _apply(k_ref, ko_ref)


def apply_rotary_embedding(q, k, tables):
    """Apply RoPE to q, k of shape [B, H, T, D] using precomputed tables."""
    cos_t, sina_t, sinb_t = tables["cos"], tables["sin_a"], tables["sin_b"]
    lane, rows, half = tables["lane"], tables["rows"], tables["half"]

    B, H, T, D = q.shape
    assert k.shape == (B, H, T, D)
    assert T * D == rows * lane
    dtype = q.dtype
    itemsize = jnp.dtype(dtype).itemsize

    bh = B * H
    n_flat = bh * rows
    qf = q.reshape(n_flat, lane)                   # free reshapes (contiguous)
    kf = k.reshape(n_flat, lane)

    row_tile, case = _pick_flat_tile(n_flat, rows, lane, itemsize)
    grid = (n_flat // row_tile,)

    data_spec = pl.BlockSpec((row_tile, lane), lambda i: (i, 0))

    if case == "whole_heads":
        # Each block covers whole head slabs; give it a pre-tiled table block
        # with a constant block index -> DMA'd once, VMEM-resident after that.
        period_blocks = 1
        slice_tables = False
        reps = row_tile // rows
        if reps > 1:
            cos_in = jnp.tile(cos_t, (reps, 1))
            sina_in = jnp.tile(sina_t, (reps, 1))
            sinb_in = jnp.tile(sinb_t, (reps, 1))
        else:
            cos_in, sina_in, sinb_in = cos_t, sina_t, sinb_t
        tab_rows = row_tile
        tab_spec = pl.BlockSpec((tab_rows, lane), lambda i: (0, 0))
    else:
        # "within_head": row_tile divides rows, so blocks never cross a head
        # boundary.  Keep the full table resident and slice it in-kernel when
        # it fits; otherwise stream matching table blocks.
        period_blocks = rows // row_tile
        cos_in, sina_in, sinb_in = cos_t, sina_t, sinb_t
        if 3 * rows * lane * 4 <= _MAX_RESIDENT_TABLE_BYTES:
            slice_tables = True
            tab_rows = rows
            tab_spec = pl.BlockSpec((tab_rows, lane), lambda i: (0, 0))
        else:
            slice_tables = False
            tab_rows = row_tile
            tab_spec = pl.BlockSpec((tab_rows, lane),
                                    lambda i: (i % period_blocks, 0))

    kernel = functools.partial(_rope_kernel, half=half, row_tile=row_tile,
                               period_blocks=period_blocks,
                               slice_tables=slice_tables)

    # VMEM budget: q/k/q_out/k_out double-buffered + tables (+ slack).
    block_bytes = row_tile * lane * itemsize
    table_bytes = 3 * tab_rows * lane * 4
    vmem_est = 8 * block_bytes + 2 * table_bytes + (2 << 20)
    vmem_limit = int(min(56 * 2**20, max(32 * 2**20, vmem_est)))

    qo, ko = pl.pallas_call(
        kernel,
        out_shape=(
            jax.ShapeDtypeStruct((n_flat, lane), dtype),
            jax.ShapeDtypeStruct((n_flat, lane), dtype),
        ),
        grid_spec=pltpu.PrefetchScalarGridSpec(
            num_scalar_prefetch=0,
            grid=grid,
            in_specs=[data_spec, data_spec, tab_spec, tab_spec, tab_spec],
            out_specs=[data_spec, data_spec],
        ),
        compiler_params=pltpu.CompilerParams(
            dimension_semantics=("parallel",),
            vmem_limit_bytes=vmem_limit,
        ),
        # NOTE: if q/k are dead after RoPE, add input_output_aliases={0: 0, 1: 1}
        # so the outputs reuse the q/k HBM buffers (not done here because the
        # test below still reads q/k for the reference check).
    )(qf, kf, cos_in, sina_in, sinb_in)

    return qo.reshape(B, H, T, D), ko.reshape(B, H, T, D)


def rotary_embedding(q, k, cos_cached, sin_cached):
    """Convenience wrapper matching RotaryEmbedding.forward(q, k) (input_pos=None)."""
    T, D = q.shape[2], q.shape[3]
    tables = build_rope_kernel_tables(cos_cached, sin_cached, T, D)
    return apply_rotary_embedding(q, k, tables)


# ----------------------------- reference (plain JAX) -------------------------
def _rotate_half(x):
    d = x.shape[-1]
    x1, x2 = x[..., : d // 2], x[..., d // 2:]
    return jnp.concatenate([-x2, x1], axis=-1)


def rotary_embedding_ref(q, k, cos_cached, sin_cached):
    dtype = q.dtype
    T = q.shape[2]
    cos = cos_cached[None, None, :T, :]
    sin = sin_cached[None, None, :T, :]
    qf, kf = q.astype(jnp.float32), k.astype(jnp.float32)
    q_out = qf * cos + _rotate_half(qf) * sin
    k_out = kf * cos + _rotate_half(kf) * sin
    return q_out.astype(dtype), k_out.astype(dtype)


# ----------------------------- main -------------------------------------------
if __name__ == "__main__":
    # Config-implied shapes (small): head_size=32, block_size(max_seq_len)=64,
    # base=10000, scale=1.0; q/k: [batch=2, n_head=4, seq=8, head_size=32]
    B, H, T, D = 2, 4, 8, 32
    MAX_SEQ = 64

    key = jax.random.PRNGKey(0)
    kq, kk = jax.random.split(key)
    q = jax.random.normal(kq, (B, H, T, D), dtype=jnp.float32)
    k = jax.random.normal(kk, (B, H, T, D), dtype=jnp.float32)

    cos_cached, sin_cached = build_rope_cache(D, MAX_SEQ, base=10000.0, scale=1.0)

    # Hoisted table prep: build once per (T, D), reuse every forward.
    tables = build_rope_kernel_tables(cos_cached, sin_cached, T, D)

    q_out, k_out = apply_rotary_embedding(q, k, tables)
    jax.block_until_ready((q_out, k_out))

    q_ref, k_ref = rotary_embedding_ref(q, k, cos_cached, sin_cached)
    assert jnp.allclose(q_out, q_ref, atol=1e-5, rtol=1e-5), "q mismatch"
    assert jnp.allclose(k_out, k_ref, atol=1e-5, rtol=1e-5), "k mismatch"

    print("KERNEL_OK")
</pallas_src>

<mosaic_0001>
module attributes {stable_mosaic.version = 11 : i64} {
  func.func @_rope_kernel(%arg0: i32, %arg1: memref<8x128xf32, #tpu.memory_space<vmem>>, %arg2: memref<8x128xf32, #tpu.memory_space<vmem>>, %arg3: memref<8x128xf32, #tpu.memory_space<vmem>>, %arg4: memref<8x128xf32, #tpu.memory_space<vmem>>, %arg5: memref<8x128xf32, #tpu.memory_space<vmem>>, %arg6: memref<8x128xf32, #tpu.memory_space<vmem>>, %arg7: memref<8x128xf32, #tpu.memory_space<vmem>>) attributes {dimension_semantics = [#tpu.dimension_semantics<parallel>], iteration_bounds = array<i64: 2>, scalar_prefetch = 0 : i64, scratch_operands = 0 : i64, tpu.core_type = #tpu.core_type<tc>, window_params = [{transform_indices = @transform_0, window_bounds = array<i64: 8, 128>}, {transform_indices = @transform_1, window_bounds = array<i64: 8, 128>}, {pipeline_mode = #tpu.pipeline_mode<synchronous>, transform_indices = @transform_2, window_bounds = array<i64: 8, 128>}, {pipeline_mode = #tpu.pipeline_mode<synchronous>, transform_indices = @transform_3, window_bounds = array<i64: 8, 128>}, {pipeline_mode = #tpu.pipeline_mode<synchronous>, transform_indices = @transform_4, window_bounds = array<i64: 8, 128>}, {transform_indices = @transform_5, window_bounds = array<i64: 8, 128>}, {transform_indices = @transform_6, window_bounds = array<i64: 8, 128>}]} {
    %c0 = arith.constant 0 : index
    %c0_0 = arith.constant 0 : index
    %0 = vector.load %arg3[%c0, %c0_0] : memref<8x128xf32, #tpu.memory_space<vmem>>, vector<8x128xf32>
    %c0_1 = arith.constant 0 : index
    %c0_2 = arith.constant 0 : index
    %1 = vector.load %arg4[%c0_1, %c0_2] : memref<8x128xf32, #tpu.memory_space<vmem>>, vector<8x128xf32>
    %c0_3 = arith.constant 0 : index
    %c0_4 = arith.constant 0 : index
    %2 = vector.load %arg5[%c0_3, %c0_4] : memref<8x128xf32, #tpu.memory_space<vmem>>, vector<8x128xf32>
    %c0_5 = arith.constant 0 : index
    %c0_6 = arith.constant 0 : index
    %3 = vector.load %arg1[%c0_5, %c0_6] : memref<8x128xf32, #tpu.memory_space<vmem>>, vector<8x128xf32>
    %4 = vector.extract_strided_slice %3 {offsets = [0, 16], sizes = [8, 112], strides = [1, 1]} : vector<8x128xf32> to vector<8x112xf32>
    %5 = vector.extract_strided_slice %3 {offsets = [0, 0], sizes = [8, 16], strides = [1, 1]} : vector<8x128xf32> to vector<8x16xf32>
    %6 = tpu.concatenate %4, %5 in 1 : vector<8x112xf32>, vector<8x16xf32> -> vector<8x128xf32>
    %7 = vector.extract_strided_slice %3 {offsets = [0, 112], sizes = [8, 16], strides = [1, 1]} : vector<8x128xf32> to vector<8x16xf32>
    %8 = vector.extract_strided_slice %3 {offsets = [0, 0], sizes = [8, 112], strides = [1, 1]} : vector<8x128xf32> to vector<8x112xf32>
    %9 = tpu.concatenate %7, %8 in 1 : vector<8x16xf32>, vector<8x112xf32> -> vector<8x128xf32>
    %10 = arith.mulf %3, %0 : vector<8x128xf32>
    %11 = arith.mulf %6, %1 : vector<8x128xf32>
    %12 = arith.addf %10, %11 : vector<8x128xf32>
    %13 = arith.mulf %9, %2 : vector<8x128xf32>
    %14 = arith.addf %12, %13 : vector<8x128xf32>
    %c0_7 = arith.constant 0 : index
    %c0_8 = arith.constant 0 : index
    %15 = vector.load %arg6[%c0_7, %c0_8] : memref<8x128xf32, #tpu.memory_space<vmem>>, vector<8x128xf32>
    tpu.vector_store %arg6[%c0_7, %c0_8], %14 {strides = array<i32>} : memref<8x128xf32, #tpu.memory_space<vmem>>, vector<8x128xf32>,
    %c0_9 = arith.constant 0 : index
    %c0_10 = arith.constant 0 : index
    %16 = vector.load %arg2[%c0_9, %c0_10] : memref<8x128xf32, #tpu.memory_space<vmem>>, vector<8x128xf32>
    %17 = vector.extract_strided_slice %16 {offsets = [0, 16], sizes = [8, 112], strides = [1, 1]} : vector<8x128xf32> to vector<8x112xf32>
    %18 = vector.extract_strided_slice %16 {offsets = [0, 0], sizes = [8, 16], strides = [1, 1]} : vector<8x128xf32> to vector<8x16xf32>
    %19 = tpu.concatenate %17, %18 in 1 : vector<8x112xf32>, vector<8x16xf32> -> vector<8x128xf32>
    %20 = vector.extract_strided_slice %16 {offsets = [0, 112], sizes = [8, 16], strides = [1, 1]} : vector<8x128xf32> to vector<8x16xf32>
    %21 = vector.extract_strided_slice %16 {offsets = [0, 0], sizes = [8, 112], strides = [1, 1]} : vector<8x128xf32> to vector<8x112xf32>
    %22 = tpu.concatenate %20, %21 in 1 : vector<8x16xf32>, vector<8x112xf32> -> vector<8x128xf32>
    %23 = arith.mulf %16, %0 : vector<8x128xf32>
    %24 = arith.mulf %19, %1 : vector<8x128xf32>
    %25 = arith.addf %23, %24 : vector<8x128xf32>
    %26 = arith.mulf %22, %2 : vector<8x128xf32>
    %27 = arith.addf %25, %26 : vector<8x128xf32>
    %c0_11 = arith.constant 0 : index
    %c0_12 = arith.constant 0 : index
    %28 = vector.load %arg7[%c0_11, %c0_12] : memref<8x128xf32, #tpu.memory_space<vmem>>, vector<8x128xf32>
    tpu.vector_store %arg7[%c0_11, %c0_12], %27 {strides = array<i32>} : memref<8x128xf32, #tpu.memory_space<vmem>>, vector<8x128xf32>,
    return
  }
  func.func @transform_0(%arg0: i32) -> (i32, i32) {
    %c0_i32 = arith.constant 0 : i32
    %c0_i32_0 = arith.constant 0 : i32
    return %arg0, %c0_i32 : i32, i32
  }
  func.func @transform_1(%arg0: i32) -> (i32, i32) {
    %c0_i32 = arith.constant 0 : i32
    %c0_i32_0 = arith.constant 0 : i32
    return %arg0, %c0_i32 : i32, i32
  }
  func.func @transform_2(%arg0: i32) -> (i32, i32) {
    %c0_i32 = arith.constant 0 : i32
    %c0_i32_0 = arith.constant 0 : i32
    %c0_i32_1 = arith.constant 0 : i32
    return %c0_i32, %c0_i32_0 : i32, i32
  }
  func.func @transform_3(%arg0: i32) -> (i32, i32) {
    %c0_i32 = arith.constant 0 : i32
    %c0_i32_0 = arith.constant 0 : i32
    %c0_i32_1 = arith.constant 0 : i32
    return %c0_i32, %c0_i32_0 : i32, i32
  }
  func.func @transform_4(%arg0: i32) -> (i32, i32) {
    %c0_i32 = arith.constant 0 : i32
    %c0_i32_0 = arith.constant 0 : i32
    %c0_i32_1 = arith.constant 0 : i32
    return %c0_i32, %c0_i32_0 : i32, i32
  }
  func.func @transform_5(%arg0: i32) -> (i32, i32) {
    %c0_i32 = arith.constant 0 : i32
    %c0_i32_0 = arith.constant 0 : i32
    return %arg0, %c0_i32 : i32, i32
  }
  func.func @transform_6(%arg0: i32) -> (i32, i32) {
    %c0_i32 = arith.constant 0 : i32
    %c0_i32_0 = arith.constant 0 : i32
    return %arg0, %c0_i32 : i32, i32
  }
}

</mosaic_0001>

<llo_original>
// kernel: tpu_custom_call.1
$region0: #{tpu_custom_call.1}
  #allocation0 [shape = 'u32[]', space=smem, size = 0x4, offset = 0x4, fixed_abs, tag = 'smem constant byte address 0x4 - core index']
  #allocation1 [shape = 'u32[144,128]{1,0:T(1,128)}', space=vmem, size = 0x12000, scoped, tag = 'internal scratch']
  %s0 = inlined_call_operand.hbm [shape: f32[16,128], index: 0, kind: input, shape index: {}]
  %s1 = inlined_call_operand.hbm [shape: f32[16,128], index: 1, kind: input, shape index: {}]
  %s2 = inlined_call_operand.hbm [shape: f32[8,128], index: 2, kind: input, shape index: {}]
  %s3 = inlined_call_operand.vmem [shape: f32[8,128], index: 3, kind: input, shape index: {}]
  %s4 = inlined_call_operand.hbm [shape: f32[8,128], index: 4, kind: input, shape index: {}]
  %s5 = inlined_call_operand.hbm [shape: f32[16,128], index: 5, kind: output, shape index: {0}]
  %s6 = inlined_call_operand.hbm [shape: f32[16,128], index: 6, kind: output, shape index: {1}]
  %7 = xla_tuple %s5, %s6
  %s8 = sld [smem:[#allocation0]]
  $region77: #{tpu_custom_call.1} parent=0
    _
  %s10 = ssub.s32 1, %s8
  %s11 = scalar_select 0, %s10, %s8
  $region1: #{tpu_custom_call.1} parent=0
    #allocation2 [shape = 'u8[8192]{0}', space=vmem, size = 0x2000, scoped, tag = 'input window, operand 0']
    #allocation3 [shape = 's32[2]{0}', space=sflag, size = 0x8, scoped, tag = 'scoped memory for tpu_custom_call.1']
    #allocation4 [shape = 's32[2]{0}', space=sflag, size = 0x8, scoped, tag = 'scoped memory for tpu_custom_call.1']
    #allocation5 [shape = 'u8[8192]{0}', space=vmem, size = 0x2000, scoped, tag = 'input window, operand 1']
    #allocation6 [shape = 's32[2]{0}', space=sflag, size = 0x8, scoped, tag = 'scoped memory for tpu_custom_call.1']
    #allocation7 [shape = 'u8[4096]{0}', space=vmem, size = 0x1000, scoped, tag = 'input window, operand 2, single buffered']
    #allocation8 [shape = 'u8[4096]{0}', space=vmem, size = 0x1000, scoped, tag = 'input window, operand 4, single buffered']
    #allocation9 [shape = 's32[1]{0}', space=sflag, size = 0x4, scoped, tag = 'scoped memory for tpu_custom_call.1']
    #allocation10 [shape = 'u8[8192]{0}', space=vmem, size = 0x2000, scoped, tag = 'output window, operand 0']
    #allocation11 [shape = 'u8[8192]{0}', space=vmem, size = 0x2000, scoped, tag = 'output window, operand 1']
    #allocation12 [shape = 's32[2]{0}', space=sflag, size = 0x8, scoped, tag = 'scoped memory for tpu_custom_call.1']
    %12 = vsyncpa [#allocation3], 0
    %s13 = scalar_lea.sflag [#allocation3], 1
    %14 = vsyncpa %s13, 0
    %15 = vsyncpa [#allocation6], 0
    %s16 = scalar_lea.sflag [#allocation6], 1
    %17 = vsyncpa %s16, 0
    %18 = vsyncpa [#allocation9], 0
    %19 = vsyncpa [#allocation4], 0
    %s20 = scalar_lea.sflag [#allocation4], 1
    %21 = vsyncpa %s20, 0
    %22 = vsyncpa [#allocation12], 0
    %s23 = scalar_lea.sflag [#allocation12], 1
    %24 = vsyncpa %s23, 0
    loop: start=0, step=1, limit=4
    $region2: #{tpu_custom_call.1} parent=1 // loop_pre_header
      _
    $region3: #{tpu_custom_call.1} parent=1 // loop_header
      %s26 = sphi 0, %s30
      %p27 = scmp.ge.s32.totalorder %s26, 4
      %s36 = sphi 0, %s38
      %s39 = sphi 0, %s36
      %s40 = sphi 0, %s39
      %s56 = sphi 0, %s40
      %s62 = sphi 0, %s64
      %s65 = sphi 0, %s62
      %s66 = sphi 0, %s65
      %s82 = sphi 0, %s66
      %s86 = sphi 0, %s86
      %s88 = sphi 0, %s86
      %s89 = sphi 0, %s88
      %s103 = sphi 0, %s89
      %s107 = sphi 0, %s107
      %s109 = sphi 0, %s107
      %s110 = sphi 0, %s109
      %s124 = sphi 0, %s110
      %s128 = sphi 0, %s128
      %s130 = sphi 0, %s128
      %s131 = sphi 0, %s130
      %s145 = sphi 0, %s131
      %s151 = sphi 0, %s153
      %s154 = sphi 0, %s151
      %s155 = sphi 0, %s154
      %s171 = sphi 0, %s155
      %s177 = sphi 0, %s179
      %s180 = sphi 0, %s177
      %s181 = sphi 0, %s180
      %s197 = sphi 0, %s181
    $region4: #{tpu_custom_call.1} parent=1 // loop_header_branch
      %29 = sbr.rel (%p27) target = $region8
    $region5: #{tpu_custom_call.1} parent=1 // loop_body
      %s31 = ssub.s32 %s26, 1
      %s32 = ssub.s32 %s26, 2
      %s33 = sadd.s32 %s26, 1
      %s34 = ssub.s32 %s26, %s33
      %p35 = scmp.eq.s32.totalorder %s34, 0
      %s37 = sadd.s32 %s36, 1
      %s38 = scalar_select %p35, %s36, %s37
      %p41 = pneg %p35
      %p42 = scmp.eq.s32.totalorder %s26, 1
      %p43 = por %p41, %p42
      %p44 = scmp.ne.s32.totalorder %s36, %s39
      %p45 = scmp.eq.s32.totalorder %s26, 0
      %p46 = por %p44, %p45
      %p47 = scmp.ne.s32.totalorder %s36, %s39
      %p48 = scmp.eq.s32.totalorder %s31, 1
      %p49 = por %p47, %p48
      %p50 = scmp.ne.s32.totalorder %s39, %s40
      %p51 = scmp.eq.s32.totalorder %s31, 0
      %p52 = por %p50, %p51
      %p53 = scmp.ne.s32.totalorder %s39, %s40
      %p54 = scmp.eq.s32.totalorder %s32, 1
      %p55 = por %p53, %p54
      %p57 = scmp.ne.s32.totalorder %s40, %s56
      %p58 = scmp.eq.s32.totalorder %s32, 0
      %p59 = por %p57, %p58
      %s60 = ssub.s32 %s26, %s33
      %p61 = scmp.eq.s32.totalorder %s60, 0
      %s63 = sadd.s32 %s62, 1
      %s64 = scalar_select %p61, %s62, %s63
      %p67 = pneg %p61
      %p68 = scmp.eq.s32.totalorder %s26, 1
      %p69 = por %p67, %p68
      %p70 = scmp.ne.s32.totalorder %s62, %s65
      %p71 = scmp.eq.s32.totalorder %s26, 0
      %p72 = por %p70, %p71
      %p73 = scmp.ne.s32.totalorder %s62, %s65
      %p74 = scmp.eq.s32.totalorder %s31, 1
      %p75 = por %p73, %p74
      %p76 = scmp.ne.s32.totalorder %s65, %s66
      %p77 = scmp.eq.s32.totalorder %s31, 0
      %p78 = por %p76, %p77
      %p79 = scmp.ne.s32.totalorder %s65, %s66
      %p80 = scmp.eq.s32.totalorder %s32, 1
      %p81 = por %p79, %p80
      %p83 = scmp.ne.s32.totalorder %s66, %s82
      %p84 = scmp.eq.s32.totalorder %s32, 0
      %p85 = por %p83, %p84
      %s87 = sadd.s32 %s86, 1
      %p90 = scmp.eq.s32.totalorder %s26, 1
      %p91 = scmp.ne.s32.totalorder %s86, %s88
      %p92 = scmp.eq.s32.totalorder %s26, 0
      %p93 = por %p91, %p92
      %p94 = scmp.ne.s32.totalorder %s86, %s88
      %p95 = scmp.eq.s32.totalorder %s31, 1
      %p96 = por %p94, %p95
      %p97 = scmp.ne.s32.totalorder %s88, %s89
      %p98 = scmp.eq.s32.totalorder %s31, 0
      %p99 = por %p97, %p98
      %p100 = scmp.ne.s32.totalorder %s88, %s89
      %p101 = scmp.eq.s32.totalorder %s32, 1
      %p102 = por %p100, %p101
      %p104 = scmp.ne.s32.totalorder %s89, %s103
      %p105 = scmp.eq.s32.totalorder %s32, 0
      %p106 = por %p104, %p105
      %s108 = sadd.s32 %s107, 1
      %p111 = scmp.eq.s32.totalorder %s26, 1
      %p112 = scmp.ne.s32.totalorder %s107, %s109
      %p113 = scmp.eq.s32.totalorder %s26, 0
      %p114 = por %p112, %p113
      %p115 = scmp.ne.s32.totalorder %s107, %s109
      %p116 = scmp.eq.s32.totalorder %s31, 1
      %p117 = por %p115, %p116
      %p118 = scmp.ne.s32.totalorder %s109, %s110
      %p119 = scmp.eq.s32.totalorder %s31, 0
      %p120 = por %p118, %p119
      %p121 = scmp.ne.s32.totalorder %s109, %s110
      %p122 = scmp.eq.s32.totalorder %s32, 1
      %p123 = por %p121, %p122
      %p125 = scmp.ne.s32.totalorder %s110, %s124
      %p126 = scmp.eq.s32.totalorder %s32, 0
      %p127 = por %p125, %p126
      %s129 = sadd.s32 %s128, 1
      %p132 = scmp.eq.s32.totalorder %s26, 1
      %p133 = scmp.ne.s32.totalorder %s128, %s130
      %p134 = scmp.eq.s32.totalorder %s26, 0
      %p135 = por %p133, %p134
      %p136 = scmp.ne.s32.totalorder %s128, %s130
      %p137 = scmp.eq.s32.totalorder %s31, 1
      %p138 = por %p136, %p137
      %p139 = scmp.ne.s32.totalorder %s130, %s131
      %p140 = scmp.eq.s32.totalorder %s31, 0
      %p141 = por %p139, %p140
      %p142 = scmp.ne.s32.totalorder %s130, %s131
      %p143 = scmp.eq.s32.totalorder %s32, 1
      %p144 = por %p142, %p143
      %p146 = scmp.ne.s32.totalorder %s131, %s145
      %p147 = scmp.eq.s32.totalorder %s32, 0
      %p148 = por %p146, %p147
      %s149 = ssub.s32 %s26, %s33
      %p150 = scmp.eq.s32.totalorder %s149, 0
      %s152 = sadd.s32 %s151, 1
      %s153 = scalar_select %p150, %s151, %s152
      %p156 = pneg %p150
      %p157 = scmp.eq.s32.totalorder %s26, 1
      %p158 = por %p156, %p157
      %p159 = scmp.ne.s32.totalorder %s151, %s154
      %p160 = scmp.eq.s32.totalorder %s26, 0
      %p161 = por %p159, %p160
      %p162 = scmp.ne.s32.totalorder %s151, %s154
      %p163 = scmp.eq.s32.totalorder %s31, 1
      %p164 = por %p162, %p163
      %p165 = scmp.ne.s32.totalorder %s154, %s155
      %p166 = scmp.eq.s32.totalorder %s31, 0
      %p167 = por %p165, %p166
      %p168 = scmp.ne.s32.totalorder %s154, %s155
      %p169 = scmp.eq.s32.totalorder %s32, 1
      %p170 = por %p168, %p169
      %p172 = scmp.ne.s32.totalorder %s155, %s171
      %p173 = scmp.eq.s32.totalorder %s32, 0
      %p174 = por %p172, %p173
      %s175 = ssub.s32 %s26, %s33
      %p176 = scmp.eq.s32.totalorder %s175, 0
      %s178 = sadd.s32 %s177, 1
      %s179 = scalar_select %p176, %s177, %s178
      %p182 = pneg %p176
      %p183 = scmp.eq.s32.totalorder %s26, 1
      %p184 = por %p182, %p183
      %p185 = scmp.ne.s32.totalorder %s177, %s180
      %p186 = scmp.eq.s32.totalorder %s26, 0
      %p187 = por %p185, %p186
      %p188 = scmp.ne.s32.totalorder %s177, %s180
      %p189 = scmp.eq.s32.totalorder %s31, 1
      %p190 = por %p188, %p189
      %p191 = scmp.ne.s32.totalorder %s180, %s181
      %p192 = scmp.eq.s32.totalorder %s31, 0
      %p193 = por %p191, %p192
      %p194 = scmp.ne.s32.totalorder %s180, %s181
      %p195 = scmp.eq.s32.totalorder %s32, 1
      %p196 = por %p194, %p195
      %p198 = scmp.ne.s32.totalorder %s181, %s197
      %p199 = scmp.eq.s32.totalorder %s32, 0
      %p200 = por %p198, %p199
      %p201 = scmp.le.s32.totalorder 1, %s26
      %p202 = scmp.lt.s32.totalorder %s26, 3
      %p203 = pnand %p201, %p202
      %p204 = pneg %p203
      // Predicated region
      $region9: #{tpu_custom_call.1} parent=5 // pred_check
        _
      $region10: #{tpu_custom_call.1} parent=5 // pred_check_branch
        %206 = sbr.rel (%p203) target = $region12
      $region11: #{tpu_custom_call.1} parent=5 // pred_region
        %s207 = ssub.s32 %s26, 1
        // Predicated region
        $region13: #{tpu_custom_call.1} parent=11 // pred_check
          %p208 = pneg %p99
        $region14: #{tpu_custom_call.1} parent=11 // pred_check_branch
          %210 = sbr.rel (%p208) target = $region16
        $region15: #{tpu_custom_call.1} parent=11 // pred_region
          %s212 = ssub.s32 128, 128
          %213 = vsyncadd [#allocation6], %s212
          %s215 = sshll.u32 [#allocation7], 4
          %s216 = int_to_ptr.vmem [resolvable:$true] %s215
          %218 = dma.hbm_to_vmem [thread:$0]  %s2, 128, %s216, [#allocation6]
        $region16: #{tpu_custom_call.1} parent=11 // pred_fallthru
          _
        // Predicated region
        $region17: #{tpu_custom_call.1} parent=11 // pred_check
          %p219 = pneg %p120
        $region18: #{tpu_custom_call.1} parent=11 // pred_check_branch
          %221 = sbr.rel (%p219) target = $region20
        $region19: #{tpu_custom_call.1} parent=11 // pred_region
          _
        $region20: #{tpu_custom_call.1} parent=11 // pred_fallthru
          _
        // Predicated region
        $region21: #{tpu_custom_call.1} parent=11 // pred_check
          %p222 = pneg %p141
        $region22: #{tpu_custom_call.1} parent=11 // pred_check_branch
          %224 = sbr.rel (%p222) target = $region24
        $region23: #{tpu_custom_call.1} parent=11 // pred_region
          %s226 = ssub.s32 128, 128
          %227 = vsyncadd [#allocation9], %s226
          %s229 = sshll.u32 [#allocation8], 4
          %s230 = int_to_ptr.vmem [resolvable:$true] %s229
          %232 = dma.hbm_to_vmem [thread:$0]  %s4, 128, %s230, [#allocation9]
        $region24: #{tpu_custom_call.1} parent=11 // pred_fallthru
          _
      $region12: #{tpu_custom_call.1} parent=5 // pred_fallthru
        _
      %p233 = scmp.lt.s32.totalorder %s26, 2
      // Predicated region
      $region25: #{tpu_custom_call.1} parent=5 // pred_check
        %p234 = pneg %p233
      $region26: #{tpu_custom_call.1} parent=5 // pred_check_branch
        %236 = sbr.rel (%p234) target = $region28
      $region27: #{tpu_custom_call.1} parent=5 // pred_region
        // Predicated region
        $region29: #{tpu_custom_call.1} parent=27 // pred_check
          %p237 = pneg %p46
        $region30: #{tpu_custom_call.1} parent=27 // pred_check_branch
          %239 = sbr.rel (%p237) target = $region32
        $region31: #{tpu_custom_call.1} parent=27 // pred_region
          %s240 = sand.u32 %s36, 1
          %s241 = scalar_lea.sflag [#allocation3], %s240
          %s242 = sand.u32 %s36, 1
          %s243 = smul.addr %s242, 8
          %s244 = scalar_lea.vmem [#allocation2], %s243
          %s246 = ssub.s32 128, 128
          %247 = vsyncadd %s241, %s246
          %s248 = smul.addr %s26, 128
          %s249 = scalar_lea.hbm %s0, %s248
          %s251 = sshll.u32 %s244, 4
          %s252 = int_to_ptr.vmem [resolvable:$true] %s251
          %254 = dma.hbm_to_vmem [thread:$0]  %s249, 128, %s252, %s241
        $region32: #{tpu_custom_call.1} parent=27 // pred_fallthru
          _
        // Predicated region
        $region33: #{tpu_custom_call.1} parent=27 // pred_check
          %p255 = pneg %p72
        $region34: #{tpu_custom_call.1} parent=27 // pred_check_branch
          %257 = sbr.rel (%p255) target = $region36
        $region35: #{tpu_custom_call.1} parent=27 // pred_region
          %s258 = sand.u32 %s26, 1
          %s259 = scalar_lea.sflag [#allocation6], %s258
          %s260 = sand.u32 %s62, 1
          %s261 = smul.addr %s260, 8
          %s262 = scalar_lea.vmem [#allocation5], %s261
          %s264 = ssub.s32 128, 128
          %265 = vsyncadd %s259, %s264
          %s266 = smul.addr %s26, 128
          %s267 = scalar_lea.hbm %s1, %s266
          %s269 = sshll.u32 %s262, 4
          %s270 = int_to_ptr.vmem [resolvable:$true] %s269
          %272 = dma.hbm_to_vmem [thread:$0]  %s267, 128, %s270, %s259
        $region36: #{tpu_custom_call.1} parent=27 // pred_fallthru
          _
      $region28: #{tpu_custom_call.1} parent=5 // pred_fallthru
        _
      %p273 = scmp.le.s32.totalorder 1, %s26
      %p274 = scmp.lt.s32.totalorder %s26, 3
      %p275 = pnand %p273, %p274
      %p276 = pneg %p275
      // Predicated region
      $region37: #{tpu_custom_call.1} parent=5 // pred_check
        _
      $region38: #{tpu_custom_call.1} parent=5 // pred_check_branch
        %278 = sbr.rel (%p275) target = $region40
      $region39: #{tpu_custom_call.1} parent=5 // pred_region
        %s279 = ssub.s32 %s26, 1
        %s280 = sand.u32 %s39, 1
        %s281 = scalar_lea.sflag [#allocation3], %s280
        %s282 = sand.u32 %s39, 1
        %s283 = smul.addr %s282, 8
        %s284 = scalar_lea.vmem [#allocation2], %s283
        // Predicated region
        $region41: #{tpu_custom_call.1} parent=39 // pred_check
          %p285 = pneg %p52
        $region42: #{tpu_custom_call.1} parent=39 // pred_check_branch
          %287 = sbr.rel (%p285) target = $region44
        $region43: #{tpu_custom_call.1} parent=39 // pred_region
          %288 = dma.done %s281, 128
        $region44: #{tpu_custom_call.1} parent=39 // pred_fallthru
          _
        %s289 = sand.u32 %s31, 1
        %s290 = scalar_lea.sflag [#allocation6], %s289
        %s291 = sand.u32 %s65, 1
        %s292 = smul.addr %s291, 8
        %s293 = scalar_lea.vmem [#allocation5], %s292
        // Predicated region
        $region45: #{tpu_custom_call.1} parent=39 // pred_check
          %p294 = pneg %p78
        $region46: #{tpu_custom_call.1} parent=39 // pred_check_branch
          %296 = sbr.rel (%p294) target = $region48
        $region47: #{tpu_custom_call.1} parent=39 // pred_region
          %297 = dma.done %s290, 128
        $region48: #{tpu_custom_call.1} parent=39 // pred_fallthru
          _
        // Predicated region
        $region49: #{tpu_custom_call.1} parent=39 // pred_check
          %p298 = pneg %p99
        $region50: #{tpu_custom_call.1} parent=39 // pred_check_branch
          %300 = sbr.rel (%p298) target = $region52
        $region51: #{tpu_custom_call.1} parent=39 // pred_region
          %301 = dma.done [#allocation6], 128
        $region52: #{tpu_custom_call.1} parent=39 // pred_fallthru
          _
        // Predicated region
        $region53: #{tpu_custom_call.1} parent=39 // pred_check
          %p302 = pneg %p141
        $region54: #{tpu_custom_call.1} parent=39 // pred_check_branch
          %304 = sbr.rel (%p302) target = $region56
        $region55: #{tpu_custom_call.1} parent=39 // pred_region
          %305 = dma.done [#allocation9], 128
        $region56: #{tpu_custom_call.1} parent=39 // pred_fallthru
          _
        %s306 = sand.u32 %s39, 1
        %s307 = scalar_lea.sflag [#allocation3], %s306
        %s308 = sand.u32 %s39, 1
        %s309 = smul.addr %s308, 8
        %s310 = scalar_lea.vmem [#allocation2], %s309
        %p311 = pneg %p52
        %p312 = pneg %p49
        %s313 = sand.u32 %s31, 1
        %s314 = scalar_lea.sflag [#allocation6], %s313
        %s315 = sand.u32 %s65, 1
        %s316 = smul.addr %s315, 8
        %s317 = scalar_lea.vmem [#allocation5], %s316
        %p318 = pneg %p78
        %p319 = pneg %p75
        %p320 = pneg %p99
        %p321 = pneg %p96
        %p322 = pneg %p120
        %p323 = pneg %p117
        %p324 = pneg %p141
        %p325 = pneg %p138
        %p326 = pneg %p167
        %p327 = pneg %p164
        %s328 = sand.u32 %s154, 1
        %s329 = scalar_lea.sflag [#allocation4], %s328
        %s330 = sand.u32 %s154, 1
        %s331 = smul.addr %s330, 8
        %s332 = scalar_lea.vmem [#allocation10], %s331
        %p333 = pneg %p193
        %p334 = pneg %p190
        %s335 = sand.u32 %s180, 1
        %s336 = scalar_lea.sflag [#allocation12], %s335
        %s337 = sand.u32 %s180, 1
        %s338 = smul.addr %s337, 8
        %s339 = scalar_lea.vmem [#allocation11], %s338
        %v340 = vld [vmem:[#allocation7] sm:$0xff]
        %v341 = vld [vmem:[%s3] sm:$0xff]
        %v342 = vld [vmem:[#allocation8] sm:$0xff]
        %v343 = vld [vmem:[%s284] sm:$0xff]
        %345 = vrot.lane.b32.xlu0 %v343, 112
        %v346 = vpop.permute.xlu0 %345
        %348 = vrot.lane.b32.xlu0 %v343, 16
        %v349 = vpop.permute.xlu0 %348
        %v351 = vmul.f32 %v343, %v340
        %v352 = vmul.f32 %v346, %v341
        %v353 = vadd.f32 %v351, %v352
        %v354 = vmul.f32 %v349, %v342
        %v355 = vadd.f32 %v353, %v354
        %356 = vst [vmem:[%s332] sm:$0xff] %v355
        %v357 = vld [vmem:[%s293] sm:$0xff]
        %359 = vrot.lane.b32.xlu0 %v357, 112
        %v360 = vpop.permute.xlu0 %359
        %362 = vrot.lane.b32.xlu0 %v357, 16
        %v363 = vpop.permute.xlu0 %362
        %v365 = vmul.f32 %v357, %v340
        %v366 = vmul.f32 %v360, %v341
        %v367 = vadd.f32 %v365, %v366
        %v368 = vmul.f32 %v363, %v342
        %v369 = vadd.f32 %v367, %v368
        %370 = vst [vmem:[%s339] sm:$0xff] %v369
        %s371 = sand.u32 %s154, 1
        %s372 = scalar_lea.sflag [#allocation4], %s371
        %s373 = sand.u32 %s154, 1
        %s374 = smul.addr %s373, 8
        %s375 = scalar_lea.vmem [#allocation10], %s374
        %s376 = sand.u32 %s180, 1
        %s377 = scalar_lea.sflag [#allocation12], %s376
        %s378 = sand.u32 %s180, 1
        %s379 = smul.addr %s378, 8
        %s380 = scalar_lea.vmem [#allocation11], %s379
        // Predicated region
        $region57: #{tpu_custom_call.1} parent=39 // pred_check
          %p381 = pneg %p164
        $region58: #{tpu_custom_call.1} parent=39 // pred_check_branch
          %383 = sbr.rel (%p381) target = $region60
        $region59: #{tpu_custom_call.1} parent=39 // pred_region
          %s385 = ssub.s32 128, 128
          %386 = vsyncadd %s372, %s385
          %s387 = smul.addr %s31, 128
          %s388 = scalar_lea.hbm %s5, %s387
          %s390 = sshll.u32 %s375, 4
          %s391 = int_to_ptr.vmem [resolvable:$true] %s390
          %393 = dma.vmem_to_hbm [thread:$0]  %s391, 128, %s388, %s372
        $region60: #{tpu_custom_call.1} parent=39 // pred_fallthru
          _
        // Predicated region
        $region61: #{tpu_custom_call.1} parent=39 // pred_check
          %p394 = pneg %p190
        $region62: #{tpu_custom_call.1} parent=39 // pred_check_branch
          %396 = sbr.rel (%p394) target = $region64
        $region63: #{tpu_custom_call.1} parent=39 // pred_region
          %s398 = ssub.s32 128, 128
          %399 = vsyncadd %s377, %s398
          %s400 = smul.addr %s31, 128
          %s401 = scalar_lea.hbm %s6, %s400
          %s403 = sshll.u32 %s380, 4
          %s404 = int_to_ptr.vmem [resolvable:$true] %s403
          %406 = dma.vmem_to_hbm [thread:$0]  %s404, 128, %s401, %s377
        $region64: #{tpu_custom_call.1} parent=39 // pred_fallthru
          _
      $region40: #{tpu_custom_call.1} parent=5 // pred_fallthru
        _
      %p407 = scmp.le.s32.totalorder 2, %s26
      // Predicated region
      $region65: #{tpu_custom_call.1} parent=5 // pred_check
        %p408 = pneg %p407
      $region66: #{tpu_custom_call.1} parent=5 // pred_check_branch
        %410 = sbr.rel (%p408) target = $region68
      $region67: #{tpu_custom_call.1} parent=5 // pred_region
        %s411 = ssub.s32 %s26, 2
        // Predicated region
        $region69: #{tpu_custom_call.1} parent=67 // pred_check
          %p412 = pneg %p170
        $region70: #{tpu_custom_call.1} parent=67 // pred_check_branch
          %414 = sbr.rel (%p412) target = $region72
        $region71: #{tpu_custom_call.1} parent=67 // pred_region
          %s415 = sand.u32 %s155, 1
          %s416 = scalar_lea.sflag [#allocation4], %s415
          %s417 = sand.u32 %s155, 1
          %s418 = smul.addr %s417, 8
          %s419 = scalar_lea.vmem [#allocation10], %s418
          %420 = dma.done %s416, 128
        $region72: #{tpu_custom_call.1} parent=67 // pred_fallthru
          _
        // Predicated region
        $region73: #{tpu_custom_call.1} parent=67 // pred_check
          %p421 = pneg %p196
        $region74: #{tpu_custom_call.1} parent=67 // pred_check_branch
          %423 = sbr.rel (%p421) target = $region76
        $region75: #{tpu_custom_call.1} parent=67 // pred_region
          %s424 = sand.u32 %s181, 1
          %s425 = scalar_lea.sflag [#allocation12], %s424
          %s426 = sand.u32 %s181, 1
          %s427 = smul.addr %s426, 8
          %s428 = scalar_lea.vmem [#allocation11], %s427
          %429 = dma.done %s425, 128
        $region76: #{tpu_custom_call.1} parent=67 // pred_fallthru
          _
      $region68: #{tpu_custom_call.1} parent=5 // pred_fallthru
        _
    $region6: #{tpu_custom_call.1} parent=1 // loop_footer
      %s30 = sadd.s32 1, %s26
    $region7: #{tpu_custom_call.1} parent=1 // loop_footer_branch
      %25 = sbr.rel target = $region3
    $region8: #{tpu_custom_call.1} parent=1 // loop_exit
      _
    %430 = vsyncpa [#allocation3], 1
    %s431 = scalar_lea.sflag [#allocation3], 1
    %432 = vsyncpa %s431, 1
    %433 = vsyncpa [#allocation6], 1
    %s434 = scalar_lea.sflag [#allocation6], 1
    %435 = vsyncpa %s434, 1
    %436 = vsyncpa [#allocation9], 1
    %437 = vsyncpa [#allocation4], 1
    %s438 = scalar_lea.sflag [#allocation4], 1
    %439 = vsyncpa %s438, 1
    %440 = vsyncpa [#allocation12], 1
    %s441 = scalar_lea.sflag [#allocation12], 1
    %442 = vsyncpa %s441, 1

</llo_original>
